<compile_context>
chip_gen: v6e
topology: v6e:2x2x1
jax: 0.10.0
libtpu: 0.0.40
codegen_flags: <defaults>
</compile_context>

<pallas_src>
import functools

import jax
import jax.numpy as jnp
from jax.experimental import pallas as pl
from jax.experimental.pallas import tpu as pltpu


def actor_net_kernel(x_ref, w1_ref, w2_ref, b12_ref, wh_ref, bh_ref, out_ref,
                     *, min_log_std, max_log_std):
    # Matmuls run in the weights' dtype (f32 or bf16) with f32 accumulation;
    # bias adds / ReLU / clamp stay f32 (cheap on every VPU generation).
    cdt = w1_ref.dtype
    x = x_ref[...].astype(cdt)                                         # [TB, S]

    # fc1 + ReLU
    h1 = jnp.dot(x, w1_ref[...], preferred_element_type=jnp.float32)   # [TB, H]
    h1 = jnp.maximum(h1 + b12_ref[0:1, :], 0.0)

    # fc2 + ReLU
    h2 = jnp.dot(h1.astype(cdt), w2_ref[...],
                 preferred_element_type=jnp.float32)                   # [TB, H]
    h2 = jnp.maximum(h2 + b12_ref[1:2, :], 0.0)

    # Fused heads: column 0 = mu, column 1 = log_std.
    heads = jnp.dot(h2.astype(cdt), wh_ref[...],
                    preferred_element_type=jnp.float32) + bh_ref[...]  # [TB, 2]

    # log_std column: ReLU then clamp (matches the PyTorch forward).
    ls_branch = jnp.clip(jnp.maximum(heads, 0.0), min_log_std, max_log_std)
    col = jax.lax.broadcasted_iota(jnp.int32, heads.shape, dimension=1)
    out_ref[...] = jnp.where(col == 0, heads, ls_branch)


def actor_net_forward(x, params, min_log_std=-20.0, max_log_std=20.0,
                      compute_dtype=jnp.float32, block_b=512):
    """x: [B, state_dim] f32 -> (mu [B, 1], log_std [B, 1]) f32."""
    w1, w2, b12, wh, bh = params
    B, S = x.shape
    H = w1.shape[1]

    # Batch tile: multiple of 8 sublanes, capped at block_b.
    block_b = max(8, (block_b // 8) * 8)
    TB = min(block_b, pl.cdiv(B, 8) * 8)
    B_pad = pl.cdiv(B, TB) * TB
    if B_pad != B:
        x = jnp.pad(x, ((0, B_pad - B), (0, 0)))

    # Matmul weights in compute_dtype (bf16 on v6e/v7x halves HBM bytes and
    # doubles MXU throughput); biases stay f32 for the epilogue.
    w1c = w1.astype(compute_dtype)
    w2c = w2.astype(compute_dtype)
    whc = wh.astype(compute_dtype)

    kernel = functools.partial(actor_net_kernel,
                               min_log_std=min_log_std,
                               max_log_std=max_log_std)

    out = pl.pallas_call(
        kernel,
        out_shape=jax.ShapeDtypeStruct((B_pad, 2), jnp.float32),
        grid=(B_pad // TB,),
        in_specs=[
            pl.BlockSpec((TB, S), lambda i: (i, 0)),   # activations stream
            pl.BlockSpec((S, H), lambda i: (0, 0)),    # weights stay resident
            pl.BlockSpec((H, H), lambda i: (0, 0)),
            pl.BlockSpec((2, H), lambda i: (0, 0)),    # packed fc biases
            pl.BlockSpec((H, 2), lambda i: (0, 0)),    # fused head weights
            pl.BlockSpec((1, 2), lambda i: (0, 0)),    # fused head biases
        ],
        out_specs=pl.BlockSpec((TB, 2), lambda i: (i, 0)),
        compiler_params=pltpu.CompilerParams(
            dimension_semantics=("parallel",)),        # v7x: 2 TCs split batch
    )(x, w1c, w2c, b12, whc, bh)

    mu = out[:B, 0:1]
    log_std = out[:B, 1:2]
    return mu, log_std


def init_params(key, state_dim, hidden=128):
    """PyTorch nn.Linear-style uniform init, packed for the kernel:
       (w1 [S,H], w2 [H,H], b12 [2,H], w_heads [H,2], b_heads [1,2])."""
    def linear(k, fan_in, fan_out):
        k_w, k_b = jax.random.split(k)
        bound = 1.0 / jnp.sqrt(fan_in)
        w = jax.random.uniform(k_w, (fan_in, fan_out), jnp.float32, -bound, bound)
        b = jax.random.uniform(k_b, (fan_out,), jnp.float32, -bound, bound)
        return w, b

    k1, k2, k3, k4 = jax.random.split(key, 4)
    w1, b1 = linear(k1, state_dim, hidden)
    w2, b2 = linear(k2, hidden, hidden)
    wmu, bmu = linear(k3, hidden, 1)
    wls, bls = linear(k4, hidden, 1)
    b12 = jnp.stack([b1, b2], axis=0)                 # [2, H]
    wh = jnp.concatenate([wmu, wls], axis=1)          # [H, 2]
    bh = jnp.concatenate([bmu, bls], axis=0)[None]    # [1, 2]
    return (w1, w2, b12, wh, bh)


def actor_net_ref(x, params, min_log_std=-20.0, max_log_std=20.0):
    """Pure-JAX f32 reference (same math as the PyTorch module)."""
    w1, w2, b12, wh, bh = params
    h1 = jnp.maximum(x @ w1 + b12[0], 0.0)
    h2 = jnp.maximum(h1 @ w2 + b12[1], 0.0)
    heads = h2 @ wh + bh
    mu = heads[:, 0:1]
    ls = jnp.clip(jnp.maximum(heads[:, 1:2], 0.0), min_log_std, max_log_std)
    return mu, ls


if __name__ == "__main__":
    state_dim = 3   # Pendulum-v1 observation dim
    key = jax.random.PRNGKey(0)
    k_x, k_p = jax.random.split(key)
    params = init_params(k_p, state_dim)

    # Small batch (single grid point), exact f32 path.
    x = jax.random.normal(k_x, (8, state_dim), jnp.float32)
    mu, log_std = jax.block_until_ready(actor_net_forward(x, params))
    mu_r, ls_r = actor_net_ref(x, params)
    assert mu.shape == (8, 1) and log_std.shape == (8, 1)
    assert jnp.allclose(mu, mu_r, atol=1e-5, rtol=1e-5)
    assert jnp.allclose(log_std, ls_r, atol=1e-5, rtol=1e-5)

    # Larger batch exercising the batch grid + padding (B=50 -> TB=32, 2 tiles).
    x2 = jax.random.normal(k_x, (50, state_dim), jnp.float32)
    mu2, ls2 = jax.block_until_ready(actor_net_forward(x2, params, block_b=32))
    mu2_r, ls2_r = actor_net_ref(x2, params)
    assert mu2.shape == (50, 1) and ls2.shape == (50, 1)
    assert jnp.allclose(mu2, mu2_r, atol=1e-5, rtol=1e-5)
    assert jnp.allclose(ls2, ls2_r, atol=1e-5, rtol=1e-5)

    # bf16 matmul path (v6e/v7x MXU), f32 accumulate — loose tolerance.
    mu3, ls3 = jax.block_until_ready(
        actor_net_forward(x2, params, compute_dtype=jnp.bfloat16, block_b=32))
    assert jnp.allclose(mu3, mu2_r, atol=0.1, rtol=0.1)
    assert jnp.allclose(ls3, ls2_r, atol=0.1, rtol=0.1)

    print("KERNEL_OK")
</pallas_src>

<mosaic_0001>
module attributes {stable_mosaic.version = 11 : i64} {
  func.func @actor_net_kernel(%arg0: i32, %arg1: memref<8x3xf32, #tpu.memory_space<vmem>>, %arg2: memref<3x128xf32, #tpu.memory_space<vmem>>, %arg3: memref<128x128xf32, #tpu.memory_space<vmem>>, %arg4: memref<2x128xf32, #tpu.memory_space<vmem>>, %arg5: memref<128x2xf32, #tpu.memory_space<vmem>>, %arg6: memref<1x2xf32, #tpu.memory_space<vmem>>, %arg7: memref<8x2xf32, #tpu.memory_space<vmem>>) attributes {dimension_semantics = [#tpu.dimension_semantics<parallel>], iteration_bounds = array<i64: 1>, scalar_prefetch = 0 : i64, scratch_operands = 0 : i64, tpu.core_type = #tpu.core_type<tc>, window_params = [{transform_indices = @transform_0, window_bounds = array<i64: 8, 3>}, {pipeline_mode = #tpu.pipeline_mode<synchronous>, transform_indices = @transform_1, window_bounds = array<i64: 3, 128>}, {pipeline_mode = #tpu.pipeline_mode<synchronous>, transform_indices = @transform_2, window_bounds = array<i64: 128, 128>}, {pipeline_mode = #tpu.pipeline_mode<synchronous>, transform_indices = @transform_3, window_bounds = array<i64: 2, 128>}, {pipeline_mode = #tpu.pipeline_mode<synchronous>, transform_indices = @transform_4, window_bounds = array<i64: 128, 2>}, {pipeline_mode = #tpu.pipeline_mode<synchronous>, transform_indices = @transform_5, window_bounds = array<i64: 1, 2>}, {transform_indices = @transform_6, window_bounds = array<i64: 8, 2>}]} {
    %c0 = arith.constant 0 : index
    %c0_0 = arith.constant 0 : index
    %0 = vector.load %arg1[%c0, %c0_0] : memref<8x3xf32, #tpu.memory_space<vmem>>, vector<8x3xf32>
    %c0_1 = arith.constant 0 : index
    %c0_2 = arith.constant 0 : index
    %1 = vector.load %arg2[%c0_1, %c0_2] : memref<3x128xf32, #tpu.memory_space<vmem>>, vector<3x128xf32>
    %cst = arith.constant dense<0.000000e+00> : vector<8x128xf32>
    %2 = tpu.matmul %0, %1, %cst {dimension_numbers = #tpu.dot_dimension_numbers<[1], [0], [0], [1], [0, 0, 1, 1], [], []>} : vector<8x3xf32>, vector<3x128xf32>, vector<8x128xf32> -> vector<8x128xf32>
    %c0_3 = arith.constant 0 : index
    %c0_4 = arith.constant 0 : index
    %3 = vector.load %arg4[%c0_3, %c0_4] : memref<2x128xf32, #tpu.memory_space<vmem>>, vector<1x128xf32>
    %4 = vector.broadcast %3 : vector<1x128xf32> to vector<8x128xf32>
    %5 = arith.addf %2, %4 : vector<8x128xf32>
    %cst_5 = arith.constant 0.000000e+00 : f32
    %6 = vector.broadcast %cst_5 : f32 to vector<8x128xf32>
    %7 = arith.maximumf %5, %6 : vector<8x128xf32>
    %c0_6 = arith.constant 0 : index
    %c0_7 = arith.constant 0 : index
    %8 = vector.load %arg3[%c0_6, %c0_7] : memref<128x128xf32, #tpu.memory_space<vmem>>, vector<128x128xf32>
    %cst_8 = arith.constant dense<0.000000e+00> : vector<8x128xf32>
    %9 = tpu.matmul %7, %8, %cst_8 {dimension_numbers = #tpu.dot_dimension_numbers<[1], [0], [0], [1], [0, 0, 1, 1], [], []>} : vector<8x128xf32>, vector<128x128xf32>, vector<8x128xf32> -> vector<8x128xf32>
    %c1 = arith.constant 1 : index
    %c0_9 = arith.constant 0 : index
    %10 = vector.load %arg4[%c1, %c0_9] : memref<2x128xf32, #tpu.memory_space<vmem>>, vector<1x128xf32>
    %11 = vector.broadcast %10 : vector<1x128xf32> to vector<8x128xf32>
    %12 = arith.addf %9, %11 : vector<8x128xf32>
    %cst_10 = arith.constant 0.000000e+00 : f32
    %13 = vector.broadcast %cst_10 : f32 to vector<8x128xf32>
    %14 = arith.maximumf %12, %13 : vector<8x128xf32>
    %c0_11 = arith.constant 0 : index
    %c0_12 = arith.constant 0 : index
    %15 = vector.load %arg5[%c0_11, %c0_12] : memref<128x2xf32, #tpu.memory_space<vmem>>, vector<128x2xf32>
    %cst_13 = arith.constant dense<0.000000e+00> : vector<8x2xf32>
    %16 = tpu.matmul %14, %15, %cst_13 {dimension_numbers = #tpu.dot_dimension_numbers<[1], [0], [0], [1], [0, 0, 1, 1], [], []>} : vector<8x128xf32>, vector<128x2xf32>, vector<8x2xf32> -> vector<8x2xf32>
    %c0_14 = arith.constant 0 : index
    %c0_15 = arith.constant 0 : index
    %17 = vector.load %arg6[%c0_14, %c0_15] : memref<1x2xf32, #tpu.memory_space<vmem>>, vector<1x2xf32>
    %18 = vector.broadcast %17 : vector<1x2xf32> to vector<8x2xf32>
    %19 = arith.addf %16, %18 : vector<8x2xf32>
    %cst_16 = arith.constant 0.000000e+00 : f32
    %20 = vector.broadcast %cst_16 : f32 to vector<8x2xf32>
    %21 = arith.maximumf %19, %20 : vector<8x2xf32>
    %cst_17 = arith.constant -2.000000e+01 : f32
    %cst_18 = arith.constant 2.000000e+01 : f32
    %22 = vector.broadcast %cst_17 : f32 to vector<8x2xf32>
    %23 = arith.maximumf %22, %21 : vector<8x2xf32>
    %24 = vector.broadcast %cst_18 : f32 to vector<8x2xf32>
    %25 = arith.minimumf %24, %23 : vector<8x2xf32>
    %26 = tpu.iota {dimensions = array<i32: 1>} : vector<8x2xi32>
    %c0_i32 = arith.constant 0 : i32
    %27 = vector.broadcast %c0_i32 : i32 to vector<8x2xi32>
    %28 = arith.cmpi eq, %26, %27 : vector<8x2xi32>
    %29 = arith.select %28, %19, %25 : vector<8x2xi1>, vector<8x2xf32>
    %c0_19 = arith.constant 0 : index
    %c0_20 = arith.constant 0 : index
    %30 = vector.load %arg7[%c0_19, %c0_20] : memref<8x2xf32, #tpu.memory_space<vmem>>, vector<8x2xf32>
    tpu.vector_store %arg7[%c0_19, %c0_20], %29 {strides = array<i32>} : memref<8x2xf32, #tpu.memory_space<vmem>>, vector<8x2xf32>,
    return
  }
  func.func @transform_0(%arg0: i32) -> (i32, i32) {
    %c0_i32 = arith.constant 0 : i32
    %c0_i32_0 = arith.constant 0 : i32
    return %arg0, %c0_i32 : i32, i32
  }
  func.func @transform_1(%arg0: i32) -> (i32, i32) {
    %c0_i32 = arith.constant 0 : i32
    %c0_i32_0 = arith.constant 0 : i32
    %c0_i32_1 = arith.constant 0 : i32
    return %c0_i32, %c0_i32_0 : i32, i32
  }
  func.func @transform_2(%arg0: i32) -> (i32, i32) {
    %c0_i32 = arith.constant 0 : i32
    %c0_i32_0 = arith.constant 0 : i32
    %c0_i32_1 = arith.constant 0 : i32
    return %c0_i32, %c0_i32_0 : i32, i32
  }
  func.func @transform_3(%arg0: i32) -> (i32, i32) {
    %c0_i32 = arith.constant 0 : i32
    %c0_i32_0 = arith.constant 0 : i32
    %c0_i32_1 = arith.constant 0 : i32
    return %c0_i32, %c0_i32_0 : i32, i32
  }
  func.func @transform_4(%arg0: i32) -> (i32, i32) {
    %c0_i32 = arith.constant 0 : i32
    %c0_i32_0 = arith.constant 0 : i32
    %c0_i32_1 = arith.constant 0 : i32
    return %c0_i32, %c0_i32_0 : i32, i32
  }
  func.func @transform_5(%arg0: i32) -> (i32, i32) {
    %c0_i32 = arith.constant 0 : i32
    %c0_i32_0 = arith.constant 0 : i32
    %c0_i32_1 = arith.constant 0 : i32
    return %c0_i32, %c0_i32_0 : i32, i32
  }
  func.func @transform_6(%arg0: i32) -> (i32, i32) {
    %c0_i32 = arith.constant 0 : i32
    %c0_i32_0 = arith.constant 0 : i32
    return %arg0, %c0_i32 : i32, i32
  }
}

</mosaic_0001>

<llo_original>
// kernel: tpu_custom_call.1
$region0: #{tpu_custom_call.1}
  #allocation0 [shape = 'u32[]', space=smem, size = 0x4, offset = 0x4, fixed_abs, tag = 'smem constant byte address 0x4 - core index']
  #allocation1 [shape = 'u32[144,128]{1,0:T(1,128)}', space=vmem, size = 0x12000, scoped, tag = 'internal scratch']
  %s0 = inlined_call_operand.vmem [shape: f32[8,3], index: 0, kind: input, shape index: {}]
  %s1 = inlined_call_operand.vmem [shape: f32[3,128], index: 1, kind: input, shape index: {}]
  %s2 = inlined_call_operand.vmem [shape: f32[128,128], index: 2, kind: input, shape index: {}]
  %s3 = inlined_call_operand.vmem [shape: f32[2,128], index: 3, kind: input, shape index: {}]
  %s4 = inlined_call_operand.vmem [shape: f32[128,2], index: 4, kind: input, shape index: {}]
  %s5 = inlined_call_operand.vmem [shape: f32[1,2], index: 5, kind: input, shape index: {}]
  %s6 = inlined_call_operand.vmem [shape: f32[8,2], index: 6, kind: output, shape index: {}]
  %s7 = sld [smem:[#allocation0]]
  $region34: #{tpu_custom_call.1} parent=0
    _
  %s9 = ssub.s32 1, %s7
  %s10 = scalar_select 0, %s9, %s7
  // Predicated region
  $region2: #{tpu_custom_call.1} parent=0 // pred_check
    _
  $region3: #{tpu_custom_call.1} parent=0 // pred_check_branch
    %12 = sbr.rel (0) target = $region5
  $region4: #{tpu_custom_call.1} parent=0 // pred_region
    _
  $region5: #{tpu_custom_call.1} parent=0 // pred_fallthru
    _
  // Predicated region
  $region6: #{tpu_custom_call.1} parent=0 // pred_check
    _
  $region7: #{tpu_custom_call.1} parent=0 // pred_check_branch
    %14 = sbr.rel (0) target = $region9
  $region8: #{tpu_custom_call.1} parent=0 // pred_region
    _
  $region9: #{tpu_custom_call.1} parent=0 // pred_fallthru
    _
  // Predicated region
  $region10: #{tpu_custom_call.1} parent=0 // pred_check
    _
  $region11: #{tpu_custom_call.1} parent=0 // pred_check_branch
    %16 = sbr.rel (0) target = $region13
  $region12: #{tpu_custom_call.1} parent=0 // pred_region
    _
  $region13: #{tpu_custom_call.1} parent=0 // pred_fallthru
    _
  // Predicated region
  $region14: #{tpu_custom_call.1} parent=0 // pred_check
    _
  $region15: #{tpu_custom_call.1} parent=0 // pred_check_branch
    %18 = sbr.rel (0) target = $region17
  $region16: #{tpu_custom_call.1} parent=0 // pred_region
    _
  $region17: #{tpu_custom_call.1} parent=0 // pred_fallthru
    _
  // Predicated region
  $region18: #{tpu_custom_call.1} parent=0 // pred_check
    _
  $region19: #{tpu_custom_call.1} parent=0 // pred_check_branch
    %20 = sbr.rel (0) target = $region21
  $region20: #{tpu_custom_call.1} parent=0 // pred_region
    _
  $region21: #{tpu_custom_call.1} parent=0 // pred_fallthru
    _
  // Predicated region
  $region22: #{tpu_custom_call.1} parent=0 // pred_check
    _
  $region23: #{tpu_custom_call.1} parent=0 // pred_check_branch
    %22 = sbr.rel (0) target = $region25
  $region24: #{tpu_custom_call.1} parent=0 // pred_region
    _
  $region25: #{tpu_custom_call.1} parent=0 // pred_fallthru
    _
  %v23 = vld [vmem:[%s0] sm:$0xff]
  %v24 = vld [vmem:[%s1] sm:$0x7]
  %v25 = vld [vmem:[%s3] sm:$0x1]
  %v26 = vlaneseq
  %v27 = vshrl.u32 %v26, 7
  %v28 = vsub.s32 0, %v27
  %v29 = vrot.slane %v25, %v28
  %vm30 = vcmask 23552
  %v32 = vsel %vm30, %v23, 0
  %vm34 = vcmask 1042432
  %v36 = vsel %vm34, %v24, 0
  %38 = vmatprep.subr.mxu0 0.0
  %39 = vmatpush1.msra.mxu0 0.0
  %40 = vmatprep.subr.mxu0 0.0
  %41 = vmatpush1.msra.mxu0 0.0
  %42 = vmatprep.subr.mxu0 0.0
  %43 = vmatpush1.msra.mxu0 0.0
  %44 = vmatprep.subr.mxu0 0.0
  %45 = vmatpush1.msra.mxu0 0.0
  %46 = vmatprep.subr.mxu0 0.0
  %47 = vmatpush1.msra.mxu0 0.0
  %48 = vmatprep.subr.mxu0 0.0
  %49 = vmatpush1.msra.mxu0 0.0
  %50 = vmatprep.subr.mxu0 0.0
  %51 = vmatpush1.msra.mxu0 0.0
  %52 = vmatprep.subr.mxu0 0.0
  %53 = vmatpush1.msra.mxu0 0.0
  %54 = vmatprep.subr.mxu0 0.0
  %55 = vmatpush1.msra.mxu0 0.0
  %56 = vmatprep.subr.mxu0 0.0
  %57 = vmatpush1.msra.mxu0 0.0
  %58 = vmatprep.subr.mxu0 0.0
  %59 = vmatpush1.msra.mxu0 0.0
  %60 = vmatprep.subr.mxu0 0.0
  %61 = vmatpush1.msra.mxu0 0.0
  %62 = vmatprep.subr.mxu0 0.0
  %63 = vmatpush1.msra.mxu0 0.0
  %64 = vmatprep.subr.mxu0 0.0
  %65 = vmatpush1.msra.mxu0 0.0
  %66 = vmatprep.subr.mxu0 0.0
  %67 = vmatpush1.msra.mxu0 0.0
  %68 = vmatprep.subr.mxu0 0.0
  %69 = vmatpush1.msra.mxu0 %v36
  %70 = vmatprep.subr.mxu0 0.0
  %71 = vmatpush2.msra.mxu0 0.0
  %72 = vmatprep.subr.mxu0 0.0
  %73 = vmatpush2.msra.mxu0 0.0
  %74 = vmatprep.subr.mxu0 0.0
  %75 = vmatpush2.msra.mxu0 0.0
  %76 = vmatprep.subr.mxu0 0.0
  %77 = vmatpush2.msra.mxu0 0.0
  %78 = vmatprep.subr.mxu0 0.0
  %79 = vmatpush2.msra.mxu0 0.0
  %80 = vmatprep.subr.mxu0 0.0
  %81 = vmatpush2.msra.mxu0 0.0
  %82 = vmatprep.subr.mxu0 0.0
  %83 = vmatpush2.msra.mxu0 0.0
  %84 = vmatprep.subr.mxu0 0.0
  %85 = vmatpush2.msra.mxu0 0.0
  %86 = vmatprep.subr.mxu0 0.0
  %87 = vmatpush2.msra.mxu0 0.0
  %88 = vmatprep.subr.mxu0 0.0
  %89 = vmatpush2.msra.mxu0 0.0
  %90 = vmatprep.subr.mxu0 0.0
  %91 = vmatpush2.msra.mxu0 0.0
  %92 = vmatprep.subr.mxu0 0.0
  %93 = vmatpush2.msra.mxu0 0.0
  %94 = vmatprep.subr.mxu0 0.0
  %95 = vmatpush2.msra.mxu0 0.0
  %96 = vmatprep.subr.mxu0 0.0
  %97 = vmatpush2.msra.mxu0 0.0
  %98 = vmatprep.subr.mxu0 0.0
  %99 = vmatpush2.msra.mxu0 0.0
  %100 = vmatprep.subr.mxu0 0.0
  %101 = vmatpush2.msra.mxu0 0.0
  %102 = vmatprep.mubr.f32.mxu0 0.0
  %103 = vmatmul.mubr.f32.gmra.mxu0 %v32
  %v104 = vpop.f32.mrf.mxu0
  %v105 = vadd.f32 %v29, %v104
  %v106 = vpop.f32.mrf.mxu0
  %107 = vdwg.mxu0
  %v108 = vmax.f32 %v105, 0.0
  %v109 = vld [vmem:[%s2] sm:$0xff]
  %v110 = vld [vmem:[%s2 + $0x8] sm:$0xff]
  %v111 = vld [vmem:[%s2 + $0x10] sm:$0xff]
  %v112 = vld [vmem:[%s2 + $0x18] sm:$0xff]
  %v113 = vld [vmem:[%s2 + $0x20] sm:$0xff]
  %v114 = vld [vmem:[%s2 + $0x28] sm:$0xff]
  %v115 = vld [vmem:[%s2 + $0x30] sm:$0xff]
  %v116 = vld [vmem:[%s2 + $0x38] sm:$0xff]
  %v117 = vld [vmem:[%s2 + $0x40] sm:$0xff]
  %v118 = vld [vmem:[%s2 + $0x48] sm:$0xff]
  %v119 = vld [vmem:[%s2 + $0x50] sm:$0xff]
  %v120 = vld [vmem:[%s2 + $0x58] sm:$0xff]
  %v121 = vld [vmem:[%s2 + $0x60] sm:$0xff]
  %v122 = vld [vmem:[%s2 + $0x68] sm:$0xff]
  %v123 = vld [vmem:[%s2 + $0x70] sm:$0xff]
  %v124 = vld [vmem:[%s2 + $0x78] sm:$0xff]
  %v125 = vld [vmem:[%s3 + $0x1] sm:$0x1]
  %v126 = vlaneseq
  %v127 = vshrl.u32 %v126, 7
  %v128 = vsub.s32 0, %v127
  %v129 = vrot.slane %v125, %v128
  %130 = vmatprep.subr.mxu0 0.0
  %131 = vmatpush1.msra.mxu0 %v124
  %132 = vmatprep.subr.mxu0 0.0
  %133 = vmatpush1.msra.mxu0 %v123
  %134 = vmatprep.subr.mxu0 0.0
  %135 = vmatpush1.msra.mxu0 %v122
  %136 = vmatprep.subr.mxu0 0.0
  %137 = vmatpush1.msra.mxu0 %v121
  %138 = vmatprep.subr.mxu0 0.0
  %139 = vmatpush1.msra.mxu0 %v120
  %140 = vmatprep.subr.mxu0 0.0
  %141 = vmatpush1.msra.mxu0 %v119
  %142 = vmatprep.subr.mxu0 0.0
  %143 = vmatpush1.msra.mxu0 %v118
  %144 = vmatprep.subr.mxu0 0.0
  %145 = vmatpush1.msra.mxu0 %v117
  %146 = vmatprep.subr.mxu0 0.0
  %147 = vmatpush1.msra.mxu0 %v116
  %148 = vmatprep.subr.mxu0 0.0
  %149 = vmatpush1.msra.mxu0 %v115
  %150 = vmatprep.subr.mxu0 0.0
  %151 = vmatpush1.msra.mxu0 %v114
  %152 = vmatprep.subr.mxu0 0.0
  %153 = vmatpush1.msra.mxu0 %v113
  %154 = vmatprep.subr.mxu0 0.0
  %155 = vmatpush1.msra.mxu0 %v112
  %156 = vmatprep.subr.mxu0 0.0
  %157 = vmatpush1.msra.mxu0 %v111
  %158 = vmatprep.subr.mxu0 0.0
  %159 = vmatpush1.msra.mxu0 %v110
  %160 = vmatprep.subr.mxu0 0.0
  %161 = vmatpush1.msra.mxu0 %v109
  %162 = vmatprep.subr.mxu0 0.0
  %163 = vmatpush2.msra.mxu0 0.0
  %164 = vmatprep.subr.mxu0 0.0
  %165 = vmatpush2.msra.mxu0 0.0
  %166 = vmatprep.subr.mxu0 0.0
  %167 = vmatpush2.msra.mxu0 0.0
  %168 = vmatprep.subr.mxu0 0.0
  %169 = vmatpush2.msra.mxu0 0.0
  %170 = vmatprep.subr.mxu0 0.0
  %171 = vmatpush2.msra.mxu0 0.0
  %172 = vmatprep.subr.mxu0 0.0
  %173 = vmatpush2.msra.mxu0 0.0
  %174 = vmatprep.subr.mxu0 0.0
  %175 = vmatpush2.msra.mxu0 0.0
  %176 = vmatprep.subr.mxu0 0.0
  %177 = vmatpush2.msra.mxu0 0.0
  %178 = vmatprep.subr.mxu0 0.0
  %179 = vmatpush2.msra.mxu0 0.0
  %180 = vmatprep.subr.mxu0 0.0
  %181 = vmatpush2.msra.mxu0 0.0
  %182 = vmatprep.subr.mxu0 0.0
  %183 = vmatpush2.msra.mxu0 0.0
  %184 = vmatprep.subr.mxu0 0.0
  %185 = vmatpush2.msra.mxu0 0.0
  %186 = vmatprep.subr.mxu0 0.0
  %187 = vmatpush2.msra.mxu0 0.0
  %188 = vmatprep.subr.mxu0 0.0
  %189 = vmatpush2.msra.mxu0 0.0
  %190 = vmatprep.subr.mxu0 0.0
  %191 = vmatpush2.msra.mxu0 0.0
  %192 = vmatprep.subr.mxu0 0.0
  %193 = vmatpush2.msra.mxu0 0.0
  %194 = vmatprep.mubr.f32.mxu0 0.0
  %195 = vmatmul.mubr.f32.gmra.mxu0 %v108
  %v196 = vpop.f32.mrf.mxu0
  %v197 = vadd.f32 %v129, %v196
  %v198 = vpop.f32.mrf.mxu0
  %199 = vdwg.mxu0
  %v200 = vmax.f32 %v197, 0.0
  %v201 = vld [vmem:[%s4] sm:$0xff]
  %v202 = vld [vmem:[%s4 + $0x8] sm:$0xff]
  %v203 = vld [vmem:[%s4 + $0x10] sm:$0xff]
  %v204 = vld [vmem:[%s4 + $0x18] sm:$0xff]
  %v205 = vld [vmem:[%s4 + $0x20] sm:$0xff]
  %v206 = vld [vmem:[%s4 + $0x28] sm:$0xff]
  %v207 = vld [vmem:[%s4 + $0x30] sm:$0xff]
  %v208 = vld [vmem:[%s4 + $0x38] sm:$0xff]
  %v209 = vld [vmem:[%s4 + $0x40] sm:$0xff]
  %v210 = vld [vmem:[%s4 + $0x48] sm:$0xff]
  %v211 = vld [vmem:[%s4 + $0x50] sm:$0xff]
  %v212 = vld [vmem:[%s4 + $0x58] sm:$0xff]
  %v213 = vld [vmem:[%s4 + $0x60] sm:$0xff]
  %v214 = vld [vmem:[%s4 + $0x68] sm:$0xff]
  %v215 = vld [vmem:[%s4 + $0x70] sm:$0xff]
  %v216 = vld [vmem:[%s4 + $0x78] sm:$0xff]
  %v217 = vld [vmem:[%s5] sm:$0x1]
  %v219 = vlaneseq
  %v220 = vshrl.u32 %v219, 7
  %v221 = vsub.s32 0, %v220
  %v222 = vrot.slane %v217, %v221
  %224 = vmatprep.subr.mxu0 0.0
  %225 = vmatpush1.msra.mxu0 %v216
  %226 = vmatprep.subr.mxu0 0.0
  %227 = vmatpush1.msra.mxu0 %v215
  %228 = vmatprep.subr.mxu0 0.0
  %229 = vmatpush1.msra.mxu0 %v214
  %230 = vmatprep.subr.mxu0 0.0
  %231 = vmatpush1.msra.mxu0 %v213
  %232 = vmatprep.subr.mxu0 0.0
  %233 = vmatpush1.msra.mxu0 %v212
  %234 = vmatprep.subr.mxu0 0.0
  %235 = vmatpush1.msra.mxu0 %v211
  %236 = vmatprep.subr.mxu0 0.0
  %237 = vmatpush1.msra.mxu0 %v210
  %238 = vmatprep.subr.mxu0 0.0
  %239 = vmatpush1.msra.mxu0 %v209
  %240 = vmatprep.subr.mxu0 0.0
  %241 = vmatpush1.msra.mxu0 %v208
  %242 = vmatprep.subr.mxu0 0.0
  %243 = vmatpush1.msra.mxu0 %v207
  %244 = vmatprep.subr.mxu0 0.0
  %245 = vmatpush1.msra.mxu0 %v206
  %246 = vmatprep.subr.mxu0 0.0
  %247 = vmatpush1.msra.mxu0 %v205
  %248 = vmatprep.subr.mxu0 0.0
  %249 = vmatpush1.msra.mxu0 %v204
  %250 = vmatprep.subr.mxu0 0.0
  %251 = vmatpush1.msra.mxu0 %v203
  %252 = vmatprep.subr.mxu0 0.0
  %253 = vmatpush1.msra.mxu0 %v202
  %254 = vmatprep.subr.mxu0 0.0
  %255 = vmatpush1.msra.mxu0 %v201
  %256 = vmatprep.subr.mxu0 0.0
  %257 = vmatpush2.msra.mxu0 0.0
  %258 = vmatprep.subr.mxu0 0.0
  %259 = vmatpush2.msra.mxu0 0.0
  %260 = vmatprep.subr.mxu0 0.0
  %261 = vmatpush2.msra.mxu0 0.0
  %262 = vmatprep.subr.mxu0 0.0
  %263 = vmatpush2.msra.mxu0 0.0
  %264 = vmatprep.subr.mxu0 0.0
  %265 = vmatpush2.msra.mxu0 0.0
  %266 = vmatprep.subr.mxu0 0.0
  %267 = vmatpush2.msra.mxu0 0.0
  %268 = vmatprep.subr.mxu0 0.0
  %269 = vmatpush2.msra.mxu0 0.0
  %270 = vmatprep.subr.mxu0 0.0
  %271 = vmatpush2.msra.mxu0 0.0
  %272 = vmatprep.subr.mxu0 0.0
  %273 = vmatpush2.msra.mxu0 0.0
  %274 = vmatprep.subr.mxu0 0.0
  %275 = vmatpush2.msra.mxu0 0.0
  %276 = vmatprep.subr.mxu0 0.0
  %277 = vmatpush2.msra.mxu0 0.0
  %278 = vmatprep.subr.mxu0 0.0
  %279 = vmatpush2.msra.mxu0 0.0
  %280 = vmatprep.subr.mxu0 0.0
  %281 = vmatpush2.msra.mxu0 0.0
  %282 = vmatprep.subr.mxu0 0.0
  %283 = vmatpush2.msra.mxu0 0.0
  %284 = vmatprep.subr.mxu0 0.0
  %285 = vmatpush2.msra.mxu0 0.0
  %286 = vmatprep.subr.mxu0 0.0
  %287 = vmatpush2.msra.mxu0 0.0
  %288 = vmatprep.mubr.f32.mxu0 0.0
  %289 = vmatmul.mubr.f32.gmra.mxu0 %v200
  %v290 = vpop.f32.mrf.mxu0
  %v291 = vadd.f32 %v222, %v290
  %v292 = vpop.f32.mrf.mxu0
  %293 = vdwg.mxu0
  %v294 = vmax.f32 %v291, 0.0
  %v295 = vmax.f32 %v294, -20.0
  %v296 = vmin.f32 %v295, 20.0
  %v297 = vlaneseq
  %v298 = vand.u32 %v297, 127
  %vm299 = vcmp.eq.s32.totalorder %v298, 0
  %v300 = vsel %vm299, %v291, %v296
  %vm301 = vcmask 15360
  %302 = vst.msk [vmem:[%s6] sm:$0xff] %vm301, %v300
  // Predicated region
  $region26: #{tpu_custom_call.1} parent=0 // pred_check
    _
  $region27: #{tpu_custom_call.1} parent=0 // pred_check_branch
    %304 = sbr.rel (0) target = $region29
  $region28: #{tpu_custom_call.1} parent=0 // pred_region
    _
  $region29: #{tpu_custom_call.1} parent=0 // pred_fallthru
    _
  // Predicated region
  $region30: #{tpu_custom_call.1} parent=0 // pred_check
    _
  $region31: #{tpu_custom_call.1} parent=0 // pred_check_branch
    %306 = sbr.rel (0) target = $region33
  $region32: #{tpu_custom_call.1} parent=0 // pred_region
    _
  $region33: #{tpu_custom_call.1} parent=0 // pred_fallthru
    _

</llo_original>
